<compile_context>
chip_gen: v7x
topology: tpu7x:2x2x1
jax: 0.10.0
libtpu: 0.0.40
codegen_flags: <defaults>
</compile_context>

<pallas_src>
import jax
import jax.numpy as jnp
from jax.experimental import pallas as pl
from jax.experimental.pallas import tpu as pltpu


def _round_up(x, m):
    return (x + m - 1) // m * m


def simplenet_kernel(x_ref, w1_ref, b1_ref, w2_ref, b2_ref, o_ref):
    # Linear -> ReLU -> Linear, entirely in VMEM; bf16 MXU inputs, f32 accumulation.
    x = x_ref[...].astype(jnp.bfloat16)
    h = jnp.dot(x, w1_ref[...], preferred_element_type=jnp.float32) + b1_ref[...]
    h = jnp.maximum(h, 0.0).astype(jnp.bfloat16)
    y = jnp.dot(h, w2_ref[...], preferred_element_type=jnp.float32) + b2_ref[...]
    o_ref[...] = y.astype(o_ref.dtype)


def prepare_params(w1, b1, w2, b2, *, lane=128, param_dtype=jnp.bfloat16):
    """One-time parameter prep (torch layout -> padded, pre-transposed kernel layout).

    w1: [hidden, in_ch]   -> w1_p: [in_ch, hid_pad]   bf16 (padding == 0)
    b1: [hidden]          -> b1_p: [1, hid_pad]       f32  (padding == 0, ReLU keeps 0)
    w2: [out_ch, hidden]  -> w2_p: [hid_pad, out_ch]  bf16 (padded rows == 0)
    b2: [out_ch]          -> b2_p: [1, out_ch]        f32
    """
    hidden, in_ch = w1.shape
    out_ch = w2.shape[0]
    hid_pad = _round_up(hidden, lane)

    w1_p = jnp.zeros((in_ch, hid_pad), param_dtype).at[:, :hidden].set(
        w1.T.astype(param_dtype))
    b1_p = jnp.zeros((1, hid_pad), jnp.float32).at[:, :hidden].set(
        b1[None, :].astype(jnp.float32))
    w2_p = jnp.zeros((hid_pad, out_ch), param_dtype).at[:hidden, :].set(
        w2.T.astype(param_dtype))
    b2_p = b2[None, :].astype(jnp.float32)
    return w1_p, b1_p, w2_p, b2_p


def _pick_tb(B, in_ch, out_ch, hid_pad, x_itemsize, block_batch):
    # Aim for >=2 grid steps so "parallel" semantics can shard the batch across the
    # two v7x TensorCores (neutral on single-TC v5e/v6e).
    tb = min(block_batch, max(8, _round_up(pl.cdiv(B, 2), 8)))
    # Cap by a VMEM budget that is comfortable on every generation (v7x: 64 MiB phys):
    # double-buffered x + out blocks plus the f32 hidden intermediate, per batch row.
    per_row = 2 * in_ch * x_itemsize + 2 * out_ch * 4 + hid_pad * 4
    budget = 24 << 20
    tb_cap = max(8, (budget // per_row) // 8 * 8)
    return int(min(tb, tb_cap))


def simplenet_forward(x, w1_p, b1_p, w2_p, b2_p, *, block_batch=1024):
    """x: [B, in_ch] (f32 or bf16). Params come from prepare_params()."""
    B, in_ch = x.shape
    hid_pad = w1_p.shape[1]
    out_ch = w2_p.shape[1]
    x_itemsize = jnp.dtype(x.dtype).itemsize
    w_itemsize = jnp.dtype(w1_p.dtype).itemsize

    tb = _pick_tb(B, in_ch, out_ch, hid_pad, x_itemsize, block_batch)
    grid = (pl.cdiv(B, tb),)  # ragged last tile is masked by Pallas, no wrapper pad

    # Explicit scoped-VMEM request: actual need with 2x headroom, clamped to stay
    # above v5e's 16 MiB default scope and well under v7x's 64 MiB physical VMEM.
    vmem_need = (2 * tb * in_ch * x_itemsize              # x blocks (double-buffered)
                 + 2 * tb * out_ch * 4                    # out blocks (double-buffered)
                 + 2 * (in_ch * hid_pad + hid_pad * out_ch) * w_itemsize  # weights
                 + 2 * (hid_pad + out_ch) * 4             # biases
                 + tb * hid_pad * 4)                      # f32 hidden intermediate
    vmem_limit = int(min(max(2 * vmem_need, 16 << 20), 48 << 20))

    flops = 2 * B * (in_ch * hid_pad + hid_pad * out_ch)
    bytes_accessed = (B * in_ch * x_itemsize + B * out_ch * 4
                      + (in_ch * hid_pad + hid_pad * out_ch) * w_itemsize
                      + (hid_pad + out_ch) * 4)

    return pl.pallas_call(
        simplenet_kernel,
        out_shape=jax.ShapeDtypeStruct((B, out_ch), jnp.float32),
        grid_spec=pltpu.PrefetchScalarGridSpec(
            num_scalar_prefetch=0,
            grid=grid,
            in_specs=[
                # x: streamed per batch tile.
                pl.BlockSpec((tb, in_ch), lambda i: (i, 0)),
                # Weights / biases: constant index_map -> VMEM-resident across steps.
                # TODO(synk): add pipeline_mode=pl.Buffered(1) on these four if
                # in_ch/out_ch ever reach the thousands (halves resident VMEM on v7x).
                pl.BlockSpec((in_ch, hid_pad), lambda i: (0, 0)),
                pl.BlockSpec((1, hid_pad), lambda i: (0, 0)),
                pl.BlockSpec((hid_pad, out_ch), lambda i: (0, 0)),
                pl.BlockSpec((1, out_ch), lambda i: (0, 0)),
            ],
            # True-width output block (full last dim) -> only B*out_ch*4 bytes hit HBM,
            # no padded writeback and no XLA slice afterwards.
            out_specs=pl.BlockSpec((tb, out_ch), lambda i: (i, 0)),
        ),
        compiler_params=pltpu.CompilerParams(
            dimension_semantics=("parallel",),   # lets v7x split the batch across TCs
            vmem_limit_bytes=vmem_limit,
        ),
        cost_estimate=pl.CostEstimate(
            flops=flops, transcendentals=0, bytes_accessed=bytes_accessed),
    )(x, w1_p, b1_p, w2_p, b2_p)


def init_params(key, in_ch, out_ch, hidden=10):
    # Deterministic init mimicking torch.nn.Linear: U(-1/sqrt(fan_in), 1/sqrt(fan_in))
    k1, k2, k3, k4 = jax.random.split(key, 4)
    bound1 = 1.0 / jnp.sqrt(jnp.float32(in_ch))
    bound2 = 1.0 / jnp.sqrt(jnp.float32(hidden))
    w1 = jax.random.uniform(k1, (hidden, in_ch), jnp.float32, -bound1, bound1)
    b1 = jax.random.uniform(k2, (hidden,), jnp.float32, -bound1, bound1)
    w2 = jax.random.uniform(k3, (out_ch, hidden), jnp.float32, -bound2, bound2)
    b2 = jax.random.uniform(k4, (out_ch,), jnp.float32, -bound2, bound2)
    return w1, b1, w2, b2


if __name__ == "__main__":
    key = jax.random.PRNGKey(0)
    kx, kp = jax.random.split(key)

    # batch=20 deliberately not a multiple of the 16-row tile -> exercises the
    # masked ragged last tile and the >=2-step grid split.
    batch, in_ch, out_ch, hidden = 20, 32, 16, 10
    x = jax.random.normal(kx, (batch, in_ch), jnp.float32)
    w1, b1, w2, b2 = init_params(kp, in_ch, out_ch, hidden)

    # One-time parameter prep (transpose + zero-pad hidden to 128, bf16 weights).
    w1_p, b1_p, w2_p, b2_p = prepare_params(w1, b1, w2, b2)

    out = simplenet_forward(x, w1_p, b1_p, w2_p, b2_p)
    out = jax.block_until_ready(out)

    # Cross-check against a pure-JAX f32 reference of the original module.
    ref = jnp.maximum(x @ w1.T + b1, 0.0) @ w2.T + b2
    assert out.shape == (batch, out_ch)
    # bf16 weight/MXU path -> loosened tolerance vs. the f32 reference.
    assert jnp.allclose(out, ref, atol=5e-2, rtol=5e-2), float(
        jnp.max(jnp.abs(out - ref)))

    print("KERNEL_OK")
</pallas_src>

<mosaic_0001>
module attributes {stable_mosaic.version = 11 : i64} {
  func.func @simplenet_kernel(%arg0: i32, %arg1: memref<16x32xf32, #tpu.memory_space<vmem>>, %arg2: memref<32x128xbf16, #tpu.memory_space<vmem>>, %arg3: memref<1x128xf32, #tpu.memory_space<vmem>>, %arg4: memref<128x16xbf16, #tpu.memory_space<vmem>>, %arg5: memref<1x16xf32, #tpu.memory_space<vmem>>, %arg6: memref<16x16xf32, #tpu.memory_space<vmem>>) attributes {dimension_semantics = [#tpu.dimension_semantics<parallel>], iteration_bounds = array<i64: 2>, scalar_prefetch = 0 : i64, scratch_operands = 0 : i64, tpu.core_type = #tpu.core_type<tc>, window_params = [{transform_indices = @transform_0, window_bounds = array<i64: 16, 32>}, {pipeline_mode = #tpu.pipeline_mode<synchronous>, transform_indices = @transform_1, window_bounds = array<i64: 32, 128>}, {pipeline_mode = #tpu.pipeline_mode<synchronous>, transform_indices = @transform_2, window_bounds = array<i64: 1, 128>}, {pipeline_mode = #tpu.pipeline_mode<synchronous>, transform_indices = @transform_3, window_bounds = array<i64: 128, 16>}, {pipeline_mode = #tpu.pipeline_mode<synchronous>, transform_indices = @transform_4, window_bounds = array<i64: 1, 16>}, {transform_indices = @transform_5, window_bounds = array<i64: 16, 16>}]} {
    %c0 = arith.constant 0 : index
    %c0_0 = arith.constant 0 : index
    %0 = vector.load %arg1[%c0, %c0_0] : memref<16x32xf32, #tpu.memory_space<vmem>>, vector<16x32xf32>
    %1 = arith.truncf %0 : vector<16x32xf32> to vector<16x32xbf16>
    %c0_1 = arith.constant 0 : index
    %c0_2 = arith.constant 0 : index
    %2 = vector.load %arg2[%c0_1, %c0_2] : memref<32x128xbf16, #tpu.memory_space<vmem>>, vector<32x128xbf16>
    %cst = arith.constant dense<0.000000e+00> : vector<16x128xf32>
    %3 = tpu.matmul %1, %2, %cst {dimension_numbers = #tpu.dot_dimension_numbers<[1], [0], [0], [1], [0, 0, 1, 1], [], []>} : vector<16x32xbf16>, vector<32x128xbf16>, vector<16x128xf32> -> vector<16x128xf32>
    %c0_3 = arith.constant 0 : index
    %c0_4 = arith.constant 0 : index
    %4 = vector.load %arg3[%c0_3, %c0_4] : memref<1x128xf32, #tpu.memory_space<vmem>>, vector<1x128xf32>
    %5 = vector.broadcast %4 : vector<1x128xf32> to vector<16x128xf32>
    %6 = arith.addf %3, %5 : vector<16x128xf32>
    %cst_5 = arith.constant 0.000000e+00 : f32
    %7 = vector.broadcast %cst_5 : f32 to vector<16x128xf32>
    %8 = arith.maximumf %6, %7 : vector<16x128xf32>
    %9 = arith.truncf %8 : vector<16x128xf32> to vector<16x128xbf16>
    %c0_6 = arith.constant 0 : index
    %c0_7 = arith.constant 0 : index
    %10 = vector.load %arg4[%c0_6, %c0_7] : memref<128x16xbf16, #tpu.memory_space<vmem>>, vector<128x16xbf16>
    %cst_8 = arith.constant dense<0.000000e+00> : vector<16x16xf32>
    %11 = tpu.matmul %9, %10, %cst_8 {dimension_numbers = #tpu.dot_dimension_numbers<[1], [0], [0], [1], [0, 0, 1, 1], [], []>} : vector<16x128xbf16>, vector<128x16xbf16>, vector<16x16xf32> -> vector<16x16xf32>
    %c0_9 = arith.constant 0 : index
    %c0_10 = arith.constant 0 : index
    %12 = vector.load %arg5[%c0_9, %c0_10] : memref<1x16xf32, #tpu.memory_space<vmem>>, vector<1x16xf32>
    %13 = vector.broadcast %12 : vector<1x16xf32> to vector<16x16xf32>
    %14 = arith.addf %11, %13 : vector<16x16xf32>
    %c0_11 = arith.constant 0 : index
    %c0_12 = arith.constant 0 : index
    %15 = vector.load %arg6[%c0_11, %c0_12] : memref<16x16xf32, #tpu.memory_space<vmem>>, vector<16x16xf32>
    tpu.vector_store %arg6[%c0_11, %c0_12], %14 {strides = array<i32>} : memref<16x16xf32, #tpu.memory_space<vmem>>, vector<16x16xf32>,
    return
  }
  func.func @transform_0(%arg0: i32) -> (i32, i32) {
    %c0_i32 = arith.constant 0 : i32
    %c0_i32_0 = arith.constant 0 : i32
    return %arg0, %c0_i32 : i32, i32
  }
  func.func @transform_1(%arg0: i32) -> (i32, i32) {
    %c0_i32 = arith.constant 0 : i32
    %c0_i32_0 = arith.constant 0 : i32
    %c0_i32_1 = arith.constant 0 : i32
    return %c0_i32, %c0_i32_0 : i32, i32
  }
  func.func @transform_2(%arg0: i32) -> (i32, i32) {
    %c0_i32 = arith.constant 0 : i32
    %c0_i32_0 = arith.constant 0 : i32
    %c0_i32_1 = arith.constant 0 : i32
    return %c0_i32, %c0_i32_0 : i32, i32
  }
  func.func @transform_3(%arg0: i32) -> (i32, i32) {
    %c0_i32 = arith.constant 0 : i32
    %c0_i32_0 = arith.constant 0 : i32
    %c0_i32_1 = arith.constant 0 : i32
    return %c0_i32, %c0_i32_0 : i32, i32
  }
  func.func @transform_4(%arg0: i32) -> (i32, i32) {
    %c0_i32 = arith.constant 0 : i32
    %c0_i32_0 = arith.constant 0 : i32
    %c0_i32_1 = arith.constant 0 : i32
    return %c0_i32, %c0_i32_0 : i32, i32
  }
  func.func @transform_5(%arg0: i32) -> (i32, i32) {
    %c0_i32 = arith.constant 0 : i32
    %c0_i32_0 = arith.constant 0 : i32
    return %arg0, %c0_i32 : i32, i32
  }
}

</mosaic_0001>

<llo_original>
// kernel: tpu_custom_call.1
$region0: #{tpu_custom_call.1}
  #allocation0 [shape = 'u32[]', space=smem, size = 0x4, offset = 0x4, fixed_abs, tag = 'smem constant byte address 0x4 - core index']
  #allocation1 [shape = 'u32[144,128]{1,0:T(1,128)}', space=vmem, size = 0x12000, scoped, tag = 'internal scratch']
  %s0 = inlined_call_operand.vmem [shape: f32[20,32], index: 0, kind: input, shape index: {}]
  %s1 = inlined_call_operand.vmem [shape: bf16[32,128], index: 1, kind: input, shape index: {}]
  %s2 = inlined_call_operand.vmem [shape: f32[1,128], index: 2, kind: input, shape index: {}]
  %s3 = inlined_call_operand.vmem [shape: bf16[128,16], index: 3, kind: input, shape index: {}]
  %s4 = inlined_call_operand.vmem [shape: f32[1,16], index: 4, kind: input, shape index: {}]
  %s5 = inlined_call_operand.vmem [shape: f32[20,16], index: 5, kind: output, shape index: {}]
  %s6 = sld [smem:[#allocation0]]
  $region101: #{tpu_custom_call.1} parent=0
    _
  %s8 = ssub.s32 1, %s6
  %s9 = scalar_select 0, %s8, %s6
  $region1: #{tpu_custom_call.1} parent=0
    #allocation2 [shape = 'u8[16384]{0}', space=vmem, size = 0x4000, scoped, tag = 'output window, operand 0']
    loop: start=0, step=1, limit=4
    $region2: #{tpu_custom_call.1} parent=1 // loop_pre_header
      _
    $region3: #{tpu_custom_call.1} parent=1 // loop_header
      %s11 = sphi 0, %s15
      %p12 = scmp.ge.s32.totalorder %s11, 4
      %s21 = sphi 0, %s23
      %s24 = sphi 0, %s21
      %s25 = sphi 0, %s24
      %s41 = sphi 0, %s25
      %s45 = sphi 0, %s45
      %s47 = sphi 0, %s45
      %s48 = sphi 0, %s47
      %s62 = sphi 0, %s48
      %s66 = sphi 0, %s66
      %s68 = sphi 0, %s66
      %s69 = sphi 0, %s68
      %s83 = sphi 0, %s69
      %s87 = sphi 0, %s87
      %s89 = sphi 0, %s87
      %s90 = sphi 0, %s89
      %s104 = sphi 0, %s90
      %s108 = sphi 0, %s108
      %s110 = sphi 0, %s108
      %s111 = sphi 0, %s110
      %s125 = sphi 0, %s111
      %s131 = sphi 0, %s133
      %s134 = sphi 0, %s131
      %s135 = sphi 0, %s134
      %s151 = sphi 0, %s135
    $region4: #{tpu_custom_call.1} parent=1 // loop_header_branch
      %14 = sbr.rel (%p12) target = $region8
    $region5: #{tpu_custom_call.1} parent=1 // loop_body
      %s16 = ssub.s32 %s11, 1
      %s17 = ssub.s32 %s11, 2
      %s18 = sadd.s32 %s11, 1
      %s19 = ssub.s32 %s11, %s18
      %p20 = scmp.eq.s32.totalorder %s19, 0
      %s22 = sadd.s32 %s21, 1
      %s23 = scalar_select %p20, %s21, %s22
      %p26 = pneg %p20
      %p27 = scmp.eq.s32.totalorder %s11, 1
      %p28 = por %p26, %p27
      %p29 = scmp.ne.s32.totalorder %s21, %s24
      %p30 = scmp.eq.s32.totalorder %s11, 0
      %p31 = por %p29, %p30
      %p32 = scmp.ne.s32.totalorder %s21, %s24
      %p33 = scmp.eq.s32.totalorder %s16, 1
      %p34 = por %p32, %p33
      %p35 = scmp.ne.s32.totalorder %s24, %s25
      %p36 = scmp.eq.s32.totalorder %s16, 0
      %p37 = por %p35, %p36
      %p38 = scmp.ne.s32.totalorder %s24, %s25
      %p39 = scmp.eq.s32.totalorder %s17, 1
      %p40 = por %p38, %p39
      %p42 = scmp.ne.s32.totalorder %s25, %s41
      %p43 = scmp.eq.s32.totalorder %s17, 0
      %p44 = por %p42, %p43
      %s46 = sadd.s32 %s45, 1
      %p49 = scmp.eq.s32.totalorder %s11, 1
      %p50 = scmp.ne.s32.totalorder %s45, %s47
      %p51 = scmp.eq.s32.totalorder %s11, 0
      %p52 = por %p50, %p51
      %p53 = scmp.ne.s32.totalorder %s45, %s47
      %p54 = scmp.eq.s32.totalorder %s16, 1
      %p55 = por %p53, %p54
      %p56 = scmp.ne.s32.totalorder %s47, %s48
      %p57 = scmp.eq.s32.totalorder %s16, 0
      %p58 = por %p56, %p57
      %p59 = scmp.ne.s32.totalorder %s47, %s48
      %p60 = scmp.eq.s32.totalorder %s17, 1
      %p61 = por %p59, %p60
      %p63 = scmp.ne.s32.totalorder %s48, %s62
      %p64 = scmp.eq.s32.totalorder %s17, 0
      %p65 = por %p63, %p64
      %s67 = sadd.s32 %s66, 1
      %p70 = scmp.eq.s32.totalorder %s11, 1
      %p71 = scmp.ne.s32.totalorder %s66, %s68
      %p72 = scmp.eq.s32.totalorder %s11, 0
      %p73 = por %p71, %p72
      %p74 = scmp.ne.s32.totalorder %s66, %s68
      %p75 = scmp.eq.s32.totalorder %s16, 1
      %p76 = por %p74, %p75
      %p77 = scmp.ne.s32.totalorder %s68, %s69
      %p78 = scmp.eq.s32.totalorder %s16, 0
      %p79 = por %p77, %p78
      %p80 = scmp.ne.s32.totalorder %s68, %s69
      %p81 = scmp.eq.s32.totalorder %s17, 1
      %p82 = por %p80, %p81
      %p84 = scmp.ne.s32.totalorder %s69, %s83
      %p85 = scmp.eq.s32.totalorder %s17, 0
      %p86 = por %p84, %p85
      %s88 = sadd.s32 %s87, 1
      %p91 = scmp.eq.s32.totalorder %s11, 1
      %p92 = scmp.ne.s32.totalorder %s87, %s89
      %p93 = scmp.eq.s32.totalorder %s11, 0
      %p94 = por %p92, %p93
      %p95 = scmp.ne.s32.totalorder %s87, %s89
      %p96 = scmp.eq.s32.totalorder %s16, 1
      %p97 = por %p95, %p96
      %p98 = scmp.ne.s32.totalorder %s89, %s90
      %p99 = scmp.eq.s32.totalorder %s16, 0
      %p100 = por %p98, %p99
      %p101 = scmp.ne.s32.totalorder %s89, %s90
      %p102 = scmp.eq.s32.totalorder %s17, 1
      %p103 = por %p101, %p102
      %p105 = scmp.ne.s32.totalorder %s90, %s104
      %p106 = scmp.eq.s32.totalorder %s17, 0
      %p107 = por %p105, %p106
      %s109 = sadd.s32 %s108, 1
      %p112 = scmp.eq.s32.totalorder %s11, 1
      %p113 = scmp.ne.s32.totalorder %s108, %s110
      %p114 = scmp.eq.s32.totalorder %s11, 0
      %p115 = por %p113, %p114
      %p116 = scmp.ne.s32.totalorder %s108, %s110
      %p117 = scmp.eq.s32.totalorder %s16, 1
      %p118 = por %p116, %p117
      %p119 = scmp.ne.s32.totalorder %s110, %s111
      %p120 = scmp.eq.s32.totalorder %s16, 0
      %p121 = por %p119, %p120
      %p122 = scmp.ne.s32.totalorder %s110, %s111
      %p123 = scmp.eq.s32.totalorder %s17, 1
      %p124 = por %p122, %p123
      %p126 = scmp.ne.s32.totalorder %s111, %s125
      %p127 = scmp.eq.s32.totalorder %s17, 0
      %p128 = por %p126, %p127
      %s129 = ssub.s32 %s11, %s18
      %p130 = scmp.eq.s32.totalorder %s129, 0
      %s132 = sadd.s32 %s131, 1
      %s133 = scalar_select %p130, %s131, %s132
      %p136 = pneg %p130
      %p137 = scmp.eq.s32.totalorder %s11, 1
      %p138 = por %p136, %p137
      %p139 = scmp.ne.s32.totalorder %s131, %s134
      %p140 = scmp.eq.s32.totalorder %s11, 0
      %p141 = por %p139, %p140
      %p142 = scmp.ne.s32.totalorder %s131, %s134
      %p143 = scmp.eq.s32.totalorder %s16, 1
      %p144 = por %p142, %p143
      %p145 = scmp.ne.s32.totalorder %s134, %s135
      %p146 = scmp.eq.s32.totalorder %s16, 0
      %p147 = por %p145, %p146
      %p148 = scmp.ne.s32.totalorder %s134, %s135
      %p149 = scmp.eq.s32.totalorder %s17, 1
      %p150 = por %p148, %p149
      %p152 = scmp.ne.s32.totalorder %s135, %s151
      %p153 = scmp.eq.s32.totalorder %s17, 0
      %p154 = por %p152, %p153
      %p155 = scmp.le.s32.totalorder 1, %s11
      %p156 = scmp.lt.s32.totalorder %s11, 3
      %p157 = pnand %p155, %p156
      %p158 = pneg %p157
      // Predicated region
      $region9: #{tpu_custom_call.1} parent=5 // pred_check
        _
      $region10: #{tpu_custom_call.1} parent=5 // pred_check_branch
        %160 = sbr.rel (%p157) target = $region12
      $region11: #{tpu_custom_call.1} parent=5 // pred_region
        %s161 = ssub.s32 %s11, 1
        // Predicated region
        $region13: #{tpu_custom_call.1} parent=11 // pred_check
          %p162 = pneg %p58
        $region14: #{tpu_custom_call.1} parent=11 // pred_check_branch
          %164 = sbr.rel (%p162) target = $region16
        $region15: #{tpu_custom_call.1} parent=11 // pred_region
          _
        $region16: #{tpu_custom_call.1} parent=11 // pred_fallthru
          _
        // Predicated region
        $region17: #{tpu_custom_call.1} parent=11 // pred_check
          %p165 = pneg %p79
        $region18: #{tpu_custom_call.1} parent=11 // pred_check_branch
          %167 = sbr.rel (%p165) target = $region20
        $region19: #{tpu_custom_call.1} parent=11 // pred_region
          _
        $region20: #{tpu_custom_call.1} parent=11 // pred_fallthru
          _
        // Predicated region
        $region21: #{tpu_custom_call.1} parent=11 // pred_check
          %p168 = pneg %p100
        $region22: #{tpu_custom_call.1} parent=11 // pred_check_branch
          %170 = sbr.rel (%p168) target = $region24
        $region23: #{tpu_custom_call.1} parent=11 // pred_region
          _
        $region24: #{tpu_custom_call.1} parent=11 // pred_fallthru
          _
        // Predicated region
        $region25: #{tpu_custom_call.1} parent=11 // pred_check
          %p171 = pneg %p121
        $region26: #{tpu_custom_call.1} parent=11 // pred_check_branch
          %173 = sbr.rel (%p171) target = $region28
        $region27: #{tpu_custom_call.1} parent=11 // pred_region
          _
        $region28: #{tpu_custom_call.1} parent=11 // pred_fallthru
          _
      $region12: #{tpu_custom_call.1} parent=5 // pred_fallthru
        _
      %p174 = scmp.lt.s32.totalorder %s11, 2
      // Predicated region
      $region29: #{tpu_custom_call.1} parent=5 // pred_check
        %p175 = pneg %p174
      $region30: #{tpu_custom_call.1} parent=5 // pred_check_branch
        %177 = sbr.rel (%p175) target = $region32
      $region31: #{tpu_custom_call.1} parent=5 // pred_region
        // Predicated region
        $region33: #{tpu_custom_call.1} parent=31 // pred_check
          %p178 = pneg %p31
        $region34: #{tpu_custom_call.1} parent=31 // pred_check_branch
          %180 = sbr.rel (%p178) target = $region36
        $region35: #{tpu_custom_call.1} parent=31 // pred_region
          %s181 = smul.u32 2, %s11
          %s182 = ssub.s32 3, %s181
          %p183 = scmp.lt.s32.totalorder %s182, 2
          %s184 = scalar_select %p183, %s182, 2
          %s185 = smul.u32 128, %s184
          %p186 = scmp.lt.s32.totalorder %s181, 2
          %s187 = scalar_select %p186, %s181, 2
          %s188 = smul.addr %s187, 8
          %s189 = scalar_lea.vmem %s0, %s188
          %s190 = smul.u32 2, %s11
          %s191 = ssub.s32 3, %s190
          %p192 = scmp.lt.s32.totalorder %s191, 2
          %s193 = scalar_select %p192, %s191, 2
          %s194 = smul.u32 128, %s193
        $region36: #{tpu_custom_call.1} parent=31 // pred_fallthru
          _
      $region32: #{tpu_custom_call.1} parent=5 // pred_fallthru
        _
      %p195 = scmp.le.s32.totalorder 1, %s11
      %p196 = scmp.lt.s32.totalorder %s11, 3
      %p197 = pnand %p195, %p196
      %p198 = pneg %p197
      // Predicated region
      $region37: #{tpu_custom_call.1} parent=5 // pred_check
        _
      $region38: #{tpu_custom_call.1} parent=5 // pred_check_branch
        %200 = sbr.rel (%p197) target = $region40
      $region39: #{tpu_custom_call.1} parent=5 // pred_region
        %s201 = ssub.s32 %s11, 1
        %s202 = smul.u32 2, %s16
        %s203 = ssub.s32 3, %s202
        %p204 = scmp.lt.s32.totalorder %s203, 2
        %s205 = scalar_select %p204, %s203, 2
        %s206 = smul.u32 128, %s205
        %p207 = scmp.lt.s32.totalorder %s202, 2
        %s208 = scalar_select %p207, %s202, 2
        %s209 = smul.addr %s208, 8
        %s210 = scalar_lea.vmem %s0, %s209
        %p211 = pneg %p37
        %p212 = pneg %p34
        %p213 = pneg %p58
        %p214 = pneg %p55
        %p215 = pneg %p79
        %p216 = pneg %p76
        %p217 = pneg %p100
        %p218 = pneg %p97
        %p219 = pneg %p121
        %p220 = pneg %p118
        %p221 = pneg %p147
        %p222 = pneg %p144
        %s223 = sand.u32 %s134, 1
        %s224 = sand.u32 %s134, 1
        %s225 = smul.addr %s224, 16
        %s226 = scalar_lea.vmem [#allocation2], %s225
        %s227 = smul.u32 2, %s16
        %s228 = ssub.s32 3, %s227
        %p229 = scmp.lt.s32.totalorder %s228, 2
        %s230 = scalar_select %p229, %s228, 2
        %s231 = smul.u32 128, %s230
        %p232 = scmp.lt.s32.totalorder %s227, 2
        %s233 = scalar_select %p232, %s227, 2
        %s234 = smul.addr %s233, 8
        %s235 = scalar_lea.vmem %s0, %s234
        %s236 = smul.u32 2, %s16
        %s237 = ssub.s32 3, %s236
        %p238 = scmp.lt.s32.totalorder %s237, 2
        %s239 = scalar_select %p238, %s237, 2
        %s240 = smul.u32 128, %s239
        %s241 = smul.u32 2, %s16
        %s242 = ssub.s32 3, %s241
        %p243 = scmp.lt.s32.totalorder %s242, 2
        %s244 = scalar_select %p243, %s242, 2
        %s245 = smul.u32 128, %s244
        %v247 = vld [vmem:[%s235] sm:$0xff]
        %v248 = vld [vmem:[%s235 + $0x8] sm:$0xff]
        %v249 = vpack.c.bf16 %v248, %v247
        %v250 = vld [vmem:[%s1] sm:$0xf]
        %v251 = vld [vmem:[%s1 + $0x4] sm:$0xf]
        %v252 = vld [vmem:[%s1 + $0x8] sm:$0xf]
        %v253 = vld [vmem:[%s1 + $0xc] sm:$0xf]
        %v254 = vld [vmem:[%s2] sm:$0x1]
        %v256 = vlaneseq
        %v257 = vshrl.u32 %v256, 7
        %v258 = vsub.s32 0, %v257
        %v259 = vrot.slane %v254, %v258
        %v265 = vunpack.c.l.b16 %v250
        %v266 = vunpack.c.l.b16 %v251
        %v267 = vunpack.c.l.b16 %v252
        %v268 = vunpack.c.l.b16 %v253
        %v269 = vpack.c.b16 %v266, %v265
        %v270 = vpack.c.b16 %v268, %v267
        %vm273 = vcmask 261120
        %v275 = vsel %vm273, %v249, 0
        %277 = vmatprep.subr.bf16.mxu0 0
        %278 = vmatpush1.bf16.msra.mxu0 %v269
        %279 = vmatprep.subr.bf16.mxu0 0
        %280 = vmatpush1.bf16.msra.mxu0 %v270
        %281 = vmatprep.subr.bf16.mxu0 0
        %282 = vmatpush1.bf16.msra.mxu0 0
        %283 = vmatprep.subr.bf16.mxu0 0
        %284 = vmatpush1.bf16.msra.mxu0 0
        %285 = vmatprep.subr.bf16.mxu0 0
        %286 = vmatpush1.bf16.msra.mxu0 0
        %287 = vmatprep.subr.bf16.mxu0 0
        %288 = vmatpush1.bf16.msra.mxu0 0
        %289 = vmatprep.subr.bf16.mxu0 0
        %290 = vmatpush1.bf16.msra.mxu0 0
        %291 = vmatprep.subr.bf16.mxu0 0
        %292 = vmatpush1.bf16.msra.mxu0 0
        %293 = vmatprep.subr.bf16.mxu0 0
        %294 = vmatpush1.bf16.msra.mxu0 0
        %295 = vmatprep.subr.bf16.mxu0 0
        %296 = vmatpush1.bf16.msra.mxu0 0
        %297 = vmatprep.subr.bf16.mxu0 0
        %298 = vmatpush1.bf16.msra.mxu0 0
        %299 = vmatprep.subr.bf16.mxu0 0
        %300 = vmatpush1.bf16.msra.mxu0 0
        %301 = vmatprep.subr.bf16.mxu0 0
        %302 = vmatpush1.bf16.msra.mxu0 0
        %303 = vmatprep.subr.bf16.mxu0 0
        %304 = vmatpush1.bf16.msra.mxu0 0
        %305 = vmatprep.subr.bf16.mxu0 0
        %306 = vmatpush1.bf16.msra.mxu0 0
        %307 = vmatprep.subr.bf16.mxu0 0
        %308 = vmatpush1.bf16.msra.mxu0 0
        %309 = vmatprep.mubr.bf16.mxu0 0
        %310 = vmatmul.mubr.bf16.gmra.mrb[0].mxu0 %v275
        %v311 = vpop.f32.mrb[0].mxu0
        %v312 = vadd.f32 %v259, %v311
        %v313 = vpop.f32.mrb[0].mxu0
        %v314 = vpop.f32.mrb[0].mxu0
        %v315 = vadd.f32 %v259, %v314
        %v316 = vpop.f32.mrb[0].mxu0
        %317 = vdwg.mxu0
        %v318 = vmax.f32 %v312, 0.0
        %v319 = vmax.f32 %v315, 0.0
        %v320 = vpack.c.bf16 %v319, %v318
        %v321 = vld [vmem:[%s3] sm:$0xf]
        %v322 = vld [vmem:[%s3 + $0x4] sm:$0xf]
        %v323 = vld [vmem:[%s3 + $0x8] sm:$0xf]
        %v324 = vld [vmem:[%s3 + $0xc] sm:$0xf]
        %v325 = vld [vmem:[%s3 + $0x10] sm:$0xf]
        %v326 = vld [vmem:[%s3 + $0x14] sm:$0xf]
        %v327 = vld [vmem:[%s3 + $0x18] sm:$0xf]
        %v328 = vld [vmem:[%s3 + $0x1c] sm:$0xf]
        %v329 = vld [vmem:[%s3 + $0x20] sm:$0xf]
        %v330 = vld [vmem:[%s3 + $0x24] sm:$0xf]
        %v331 = vld [vmem:[%s3 + $0x28] sm:$0xf]
        %v332 = vld [vmem:[%s3 + $0x2c] sm:$0xf]
        %v333 = vld [vmem:[%s3 + $0x30] sm:$0xf]
        %v334 = vld [vmem:[%s3 + $0x34] sm:$0xf]
        %v335 = vld [vmem:[%s3 + $0x38] sm:$0xf]
        %v336 = vld [vmem:[%s3 + $0x3c] sm:$0xf]
        %v337 = vld [vmem:[%s4] sm:$0x1]
        %v339 = vlaneseq
        %v340 = vshrl.u32 %v339, 7
        %v341 = vsub.s32 0, %v340
        %v342 = vrot.slane %v337, %v341
        %v360 = vunpack.c.l.b16 %v321
        %v361 = vunpack.c.l.b16 %v322
        %v362 = vunpack.c.l.b16 %v323
        %v363 = vunpack.c.l.b16 %v324
        %v364 = vunpack.c.l.b16 %v325
        %v365 = vunpack.c.l.b16 %v326
        %v366 = vunpack.c.l.b16 %v327
        %v367 = vunpack.c.l.b16 %v328
        %v368 = vunpack.c.l.b16 %v329
        %v369 = vunpack.c.l.b16 %v330
        %v370 = vunpack.c.l.b16 %v331
        %v371 = vunpack.c.l.b16 %v332
        %v372 = vunpack.c.l.b16 %v333
        %v373 = vunpack.c.l.b16 %v334
        %v374 = vunpack.c.l.b16 %v335
        %v375 = vunpack.c.l.b16 %v336
        %v376 = vpack.c.b16 %v361, %v360
        %v377 = vpack.c.b16 %v363, %v362
        %v378 = vpack.c.b16 %v365, %v364
        %v379 = vpack.c.b16 %v367, %v366
        %v380 = vpack.c.b16 %v369, %v368
        %v381 = vpack.c.b16 %v371, %v370
        %v382 = vpack.c.b16 %v373, %v372
        %v383 = vpack.c.b16 %v375, %v374
        %392 = vmatprep.subr.bf16.mxu0 0
        %393 = vmatpush1.bf16.msra.mxu0 %v376
        %394 = vmatprep.subr.bf16.mxu0 0
        %395 = vmatpush1.bf16.msra.mxu0 %v377
        %396 = vmatprep.subr.bf16.mxu0 0
        %397 = vmatpush1.bf16.msra.mxu0 %v378
        %398 = vmatprep.subr.bf16.mxu0 0
        %399 = vmatpush1.bf16.msra.mxu0 %v379
        %400 = vmatprep.subr.bf16.mxu0 0
        %401 = vmatpush1.bf16.msra.mxu0 %v380
        %402 = vmatprep.subr.bf16.mxu0 0
        %403 = vmatpush1.bf16.msra.mxu0 %v381
        %404 = vmatprep.subr.bf16.mxu0 0
        %405 = vmatpush1.bf16.msra.mxu0 %v382
        %406 = vmatprep.subr.bf16.mxu0 0
        %407 = vmatpush1.bf16.msra.mxu0 %v383
        %408 = vmatprep.subr.bf16.mxu0 0
        %409 = vmatpush1.bf16.msra.mxu0 0
        %410 = vmatprep.subr.bf16.mxu0 0
        %411 = vmatpush1.bf16.msra.mxu0 0
        %412 = vmatprep.subr.bf16.mxu0 0
        %413 = vmatpush1.bf16.msra.mxu0 0
        %414 = vmatprep.subr.bf16.mxu0 0
        %415 = vmatpush1.bf16.msra.mxu0 0
        %416 = vmatprep.subr.bf16.mxu0 0
        %417 = vmatpush1.bf16.msra.mxu0 0
        %418 = vmatprep.subr.bf16.mxu0 0
        %419 = vmatpush1.bf16.msra.mxu0 0
        %420 = vmatprep.subr.bf16.mxu0 0
        %421 = vmatpush1.bf16.msra.mxu0 0
        %422 = vmatprep.subr.bf16.mxu0 0
        %423 = vmatpush1.bf16.msra.mxu0 0
        %424 = vmatprep.mubr.bf16.mxu0 0
        %425 = vmatmul.mubr.bf16.gmra.mrb[0].mxu0 %v320
        %v426 = vpop.f32.mrb[0].mxu0
        %v427 = vadd.f32 %v342, %v426
        %v428 = vpop.f32.mrb[0].mxu0
        %v429 = vpop.f32.mrb[0].mxu0
        %v430 = vadd.f32 %v342, %v429
        %v431 = vpop.f32.mrb[0].mxu0
        %432 = vdwg.mxu0
        %vm433 = vcmask 130048
        %434 = vst.msk [vmem:[%s226] sm:$0xff] %vm433, %v427
        %435 = vst.msk [vmem:[%s226 + $0x8] sm:$0xff] %vm433, %v430
        %s436 = sand.u32 %s134, 1
        %s437 = sand.u32 %s134, 1
        %s438 = smul.addr %s437, 16
        %s439 = scalar_lea.vmem [#allocation2], %s438
        // Predicated region
        $region41: #{tpu_custom_call.1} parent=39 // pred_check
          %p440 = pneg %p144
        $region42: #{tpu_custom_call.1} parent=39 // pred_check_branch
          %442 = sbr.rel (%p440) target = $region44
        $region43: #{tpu_custom_call.1} parent=39 // pred_region
          %s443 = smul.u32 2, %s16
          %s444 = ssub.s32 3, %s443
          %p445 = scmp.lt.s32.totalorder %s444, 2
          %s446 = scalar_select %p445, %s444, 2
          %s447 = smul.u32 128, %s446
          %p448 = scmp.ne.s32.totalorder 0, %s447
          %s449 = smul.addr %s443, 8
          %s450 = scalar_lea.vmem %s5, %s449
          // Predicated region
          $region45: #{tpu_custom_call.1} parent=43 // pred_check
            %p451 = pneg %p448
          $region46: #{tpu_custom_call.1} parent=43 // pred_check_branch
            %453 = sbr.rel (%p451) target = $region48
          $region47: #{tpu_custom_call.1} parent=43 // pred_region
            // Predicated region
            $region49: #{tpu_custom_call.1} parent=47 // pred_check
              _
            $region50: #{tpu_custom_call.1} parent=47 // pred_check_branch
              %455 = sbr.rel (0) target = $region52
            $region51: #{tpu_custom_call.1} parent=47 // pred_region
              // Predicated region
              $region71: #{tpu_custom_call.1} parent=51 // pred_check
                _
              $region72: #{tpu_custom_call.1} parent=51 // pred_check_branch
                %506 = sbr.rel (0) target = $region74
              $region73: #{tpu_custom_call.1} parent=51 // pred_region
                %s507 = sshrl.u32 %s446, 1
                // While loop
                $region75: #{tpu_custom_call.1} parent=73 // loop_pre_header
                  _
                $region76: #{tpu_custom_call.1} parent=73 // loop_header
                  %s509 = sphi 0, %s511
                  %p510 = scmp.ge.s32.totalorder %s509, %s507
                  %s514 = sphi 0, %s523
                  %s515 = sphi %s439, %s526
                  %s516 = sphi %s450, %s527
                $region77: #{tpu_custom_call.1} parent=73 // loop_header_branch
                  %513 = sbr.rel (%p510) target = $region81
                $region78: #{tpu_custom_call.1} parent=73 // loop_body
                  %v517 = vld [vmem:[%s515] sm:$0xff]
                  %518 = vst [vmem:[%s516] sm:$0xff] %v517
                  %v519 = vld [vmem:[%s515 + $0x8] sm:$0xff]
                  %520 = vst [vmem:[%s516 + $0x8] sm:$0xff] %v519
                  %s521 = sadd.s32 1, %s514
                  %p522 = scmp.ge.s32.totalorder %s521, %s507
                  %s523 = scalar_select %p522, 0, %s521
                  %s524 = smul.u32 %s523, 16
                  %s525 = smul.u32 %s523, 16
                  %s526 = scalar_lea.vmem %s439, %s524 [#allocation2]
                  %s527 = scalar_lea.vmem %s450, %s525
                $region79: #{tpu_custom_call.1} parent=73 // loop_footer
                  %s511 = sadd.s32 %s509, 1
                $region80: #{tpu_custom_call.1} parent=73 // loop_footer_branch
                  %508 = sbr.rel target = $region76
                $region81: #{tpu_custom_call.1} parent=73 // loop_exit
                  _
                %s528 = sshrl.u32 %s446, 1
                %s529 = sand.u32 %s446, 1
                %s530 = smul.u32 %s528, 2
                %s531 = smul.u32 8, %s530
                %s532 = scalar_lea.vmem %s439, %s531 [#allocation2]
                %s533 = smul.u32 8, %s530
                %s534 = scalar_lea.vmem %s450, %s533
                // While loop
                $region82: #{tpu_custom_call.1} parent=73 // loop_pre_header
                  _
                $region83: #{tpu_custom_call.1} parent=73 // loop_header
                  %s536 = sphi 0, %s538
                  %p537 = scmp.ge.s32.totalorder %s536, %s529
                  %s541 = sphi 0, %s548
                  %s542 = sphi %s532, %s551
                  %s543 = sphi %s534, %s552
                $region84: #{tpu_custom_call.1} parent=73 // loop_header_branch
                  %540 = sbr.rel (%p537) target = $region88
                $region85: #{tpu_custom_call.1} parent=73 // loop_body
                  %v544 = vld [vmem:[%s542] sm:$0xff]
                  %545 = vst [vmem:[%s543] sm:$0xff] %v544
                  %s546 = sadd.s32 1, %s541
                  %p547 = scmp.ge.s32.totalorder %s546, %s529
                  %s548 = scalar_select %p547, 0, %s546
                  %s549 = smul.u32 %s548, 8
                  %s550 = smul.u32 %s548, 8
                  %s551 = scalar_lea.vmem %s532, %s549 [#allocation2]
                  %s552 = scalar_lea.vmem %s534, %s550
                $region86: #{tpu_custom_call.1} parent=73 // loop_footer
                  %s538 = sadd.s32 %s536, 1
                $region87: #{tpu_custom_call.1} parent=73 // loop_footer_branch
                  %535 = sbr.rel target = $region83
                $region88: #{tpu_custom_call.1} parent=73 // loop_exit
                  _
              $region74: #{tpu_custom_call.1} parent=51 // pred_fallthru
                _
              // Predicated region
              $region89: #{tpu_custom_call.1} parent=51 // pred_check
                _
              $region90: #{tpu_custom_call.1} parent=51 // pred_check_branch
                %554 = sbr.rel target = $region92
              $region91: #{tpu_custom_call.1} parent=51 // pred_region
                _
              $region92: #{tpu_custom_call.1} parent=51 // pred_fallthru
                _
            $region52: #{tpu_custom_call.1} parent=47 // pred_fallthru
              _
            // Predicated region
            $region53: #{tpu_custom_call.1} parent=47 // pred_check
              _
            $region54: #{tpu_custom_call.1} parent=47 // pred_check_branch
              %457 = sbr.rel target = $region56
            $region55: #{tpu_custom_call.1} parent=47 // pred_region
              %s459 = sshrl.u32 %s446, 1
              // While loop
              $region57: #{tpu_custom_call.1} parent=55 // loop_pre_header
                _
              $region58: #{tpu_custom_call.1} parent=55 // loop_header
                %s461 = sphi 0, %s463
                %p462 = scmp.ge.s32.totalorder %s461, %s459
                %s466 = sphi 0, %s475
                %s467 = sphi %s439, %s478
                %s468 = sphi %s450, %s479
              $region59: #{tpu_custom_call.1} parent=55 // loop_header_branch
                %465 = sbr.rel (%p462) target = $region63
              $region60: #{tpu_custom_call.1} parent=55 // loop_body
                %v469 = vld [vmem:[%s467] sm:$0xff]
                %470 = vst [vmem:[%s468] sm:$0xff] %v469
                %v471 = vld [vmem:[%s467 + $0x8] sm:$0xff]
                %472 = vst [vmem:[%s468 + $0x8] sm:$0xff] %v471
                %s473 = sadd.s32 1, %s466
                %p474 = scmp.ge.s32.totalorder %s473, %s459
                %s475 = scalar_select %p474, 0, %s473
                %s476 = smul.u32 %s475, 16
                %s477 = smul.u32 %s475, 16
                %s478 = scalar_lea.vmem %s439, %s476 [#allocation2]
                %s479 = scalar_lea.vmem %s450, %s477
              $region61: #{tpu_custom_call.1} parent=55 // loop_footer
                %s463 = sadd.s32 %s461, 1
              $region62: #{tpu_custom_call.1} parent=55 // loop_footer_branch
                %460 = sbr.rel target = $region58
              $region63: #{tpu_custom_call.1} parent=55 // loop_exit
                _
              %s480 = sshrl.u32 %s446, 1
              %s481 = sand.u32 %s446, 1
              %s482 = smul.u32 %s480, 2
              %s483 = smul.u32 8, %s482
              %s484 = scalar_lea.vmem %s439, %s483 [#allocation2]
              %s485 = smul.u32 8, %s482
              %s486 = scalar_lea.vmem %s450, %s485
              // While loop
              $region64: #{tpu_custom_call.1} parent=55 // loop_pre_header
                _
              $region65: #{tpu_custom_call.1} parent=55 // loop_header
                %s488 = sphi 0, %s490
                %p489 = scmp.ge.s32.totalorder %s488, %s481
                %s493 = sphi 0, %s500
                %s494 = sphi %s484, %s503
                %s495 = sphi %s486, %s504
              $region66: #{tpu_custom_call.1} parent=55 // loop_header_branch
                %492 = sbr.rel (%p489) target = $region70
              $region67: #{tpu_custom_call.1} parent=55 // loop_body
                %v496 = vld [vmem:[%s494] sm:$0xff]
                %497 = vst [vmem:[%s495] sm:$0xff] %v496
                %s498 = sadd.s32 1, %s493
                %p499 = scmp.ge.s32.totalorder %s498, %s481
                %s500 = scalar_select %p499, 0, %s498
                %s501 = smul.u32 %s500, 8
                %s502 = smul.u32 %s500, 8
                %s503 = scalar_lea.vmem %s484, %s501 [#allocation2]
                %s504 = scalar_lea.vmem %s486, %s502
              $region68: #{tpu_custom_call.1} parent=55 // loop_footer
                %s490 = sadd.s32 %s488, 1
              $region69: #{tpu_custom_call.1} parent=55 // loop_footer_branch
                %487 = sbr.rel target = $region65
              $region70: #{tpu_custom_call.1} parent=55 // loop_exit
                _
            $region56: #{tpu_custom_call.1} parent=47 // pred_fallthru
              _
          $region48: #{tpu_custom_call.1} parent=43 // pred_fallthru
            _
          %555 = vnop
        $region44: #{tpu_custom_call.1} parent=39 // pred_fallthru
          _
      $region40: #{tpu_custom_call.1} parent=5 // pred_fallthru
        _
      %p556 = scmp.le.s32.totalorder 2, %s11
      // Predicated region
      $region93: #{tpu_custom_call.1} parent=5 // pred_check
        %p557 = pneg %p556
      $region94: #{tpu_custom_call.1} parent=5 // pred_check_branch
        %559 = sbr.rel (%p557) target = $region96
      $region95: #{tpu_custom_call.1} parent=5 // pred_region
        %s560 = ssub.s32 %s11, 2
        // Predicated region
        $region97: #{tpu_custom_call.1} parent=95 // pred_check
          %p561 = pneg %p150
        $region98: #{tpu_custom_call.1} parent=95 // pred_check_branch
          %563 = sbr.rel (%p561) target = $region100
        $region99: #{tpu_custom_call.1} parent=95 // pred_region
          %s564 = sand.u32 %s135, 1
          %s565 = sand.u32 %s135, 1
          %s566 = smul.addr %s565, 16
          %s567 = scalar_lea.vmem [#allocation2], %s566
        $region100: #{tpu_custom_call.1} parent=95 // pred_fallthru
          _
      $region96: #{tpu_custom_call.1} parent=5 // pred_fallthru
        _
    $region6: #{tpu_custom_call.1} parent=1 // loop_footer
      %s15 = sadd.s32 1, %s11
    $region7: #{tpu_custom_call.1} parent=1 // loop_footer_branch
      %10 = sbr.rel target = $region3
    $region8: #{tpu_custom_call.1} parent=1 // loop_exit
      _

</llo_original>
